<compile_context>
chip_gen: v7x
topology: tpu7x:2x2x1
jax: 0.10.0
libtpu: 0.0.40
codegen_flags: <defaults>
</compile_context>

<pallas_src>
import math

import jax
import jax.numpy as jnp
from jax import lax
from jax.experimental import pallas as pl
from jax.experimental.pallas import tpu as pltpu

_COEF = math.sqrt(math.pi) / 2.0


# ---------------------------------------------------------------------------
# Kernel factory: per-(batch, H-tile) partial sums over a (1, TH, L) block
# ---------------------------------------------------------------------------
def _make_partial_sums_kernel(*, H, W, TH, L):
    """Kernel over lane-dense (B, H, L = C*W) inputs.

    Accumulates into the resident (1, 4, L) per-batch output block:
      row 0 : sum (dnx - inp)^2                        (MSE numerator)
      row 1 : sum |inp[h+1] - inp[h]|                  (sigma numerator, unscaled)
      row 2 : sum (dnx[h+1] - dnx[h])^2                (raw h_tv of dnx)
      row 3 : sum (dnx[w+1] - dnx[w])^2 (lane 0 only)  (raw w_tv of dnx)
    Lane reduction / normalisation happens in the tiny JAX epilogue.
    """

    def kernel(dnx_ref, inp_ref, out_ref, dnx_last_ref, inp_last_ref):
        h = pl.program_id(1)
        base = h * TH                                     # first global row of tile

        # Single load of each tile feeds every reduction below; per-tile upcast
        # keeps bf16 inputs at half the HBM traffic while accumulating in f32.
        dnx_raw = dnx_ref[0].astype(jnp.float32)          # (TH, L)
        inp_raw = inp_ref[0].astype(jnp.float32)

        row_id = lax.broadcasted_iota(jnp.int32, (TH, L), 0)

        # Tail mask: the last H-tile may extend past the true H (cdiv grid).
        # Zero padded rows so every sum below ignores them (where() also stops
        # any NaN/Inf garbage in the padded region from propagating).
        row_valid = (base + row_id) < H
        dnx = jnp.where(row_valid, dnx_raw, 0.0)
        inp = jnp.where(row_valid, inp_raw, 0.0)

        # ---- cross-H-tile boundary: previous tile's last row vs our row 0 ----
        # Read the carry BEFORE overwriting it.  At h == 0 the carry holds
        # stale data (previous batch / uninitialised VMEM); the h > 0 select
        # discards it, so no extra pl.when store is needed.
        b_dnx = dnx[0:1, :] - dnx_last_ref[...]           # (1, L)
        b_inp = inp[0:1, :] - inp_last_ref[...]
        on_boundary = h > 0
        bnd_htv = jnp.where(on_boundary, b_dnx * b_dnx, 0.0)
        bnd_sig = jnp.where(on_boundary, jnp.abs(b_inp), 0.0)

        # Carry this tile's last row to the next H-tile.  For the final
        # (possibly padded) tile the carry is never consumed: the next grid
        # step has h == 0 (next batch) and discards it.
        dnx_last_ref[...] = dnx[TH - 1:TH, :]
        inp_last_ref[...] = inp[TH - 1:TH, :]

        # ---- within-tile terms (values already resident in vregs) ----------
        d = dnx - inp
        mse_row = jnp.sum(d * d, axis=0, keepdims=True)   # (1, L)

        # H-adjacency = pure sublane shift in this layout.  Pair (i, i+1) is
        # valid iff its second row is a real image row (tail handling).
        pair_id = lax.broadcasted_iota(jnp.int32, (TH - 1, L), 0)
        pair_valid = (base + pair_id + 1) < H
        hd = jnp.where(pair_valid, dnx[1:, :] - dnx[:-1, :], 0.0)
        sd = jnp.where(pair_valid, jnp.abs(inp[1:, :] - inp[:-1, :]), 0.0)
        htv_row = jnp.sum(hd * hd, axis=0, keepdims=True) + bnd_htv
        sig_row = jnp.sum(sd, axis=0, keepdims=True) + bnd_sig

        # W-adjacency = lane shift; mask the w == W-1 column of every packed
        # channel block (lane l pairs (l, l+1), invalid when l % W == W-1).
        lane_pair = lax.broadcasted_iota(jnp.int32, (TH, L - 1), 1)
        lane_valid = (lane_pair % W) != (W - 1)
        wd = jnp.where(lane_valid, dnx[:, 1:] - dnx[:, :-1], 0.0)
        # Padded rows are already zero, so no extra row mask is needed here.
        wtv_scalar = jnp.sum(wd * wd)                     # 0-d

        # ---- one stacked update -> a SINGLE accumulator read-modify-write ----
        row4 = lax.broadcasted_iota(jnp.int32, (4, L), 0)
        lane4 = lax.broadcasted_iota(jnp.int32, (4, L), 1)
        # w_tv lives as a scalar in (row 3, lane 0); the epilogue sums over
        # lanes anyway, so its lane position is irrelevant.
        upd = jnp.where(
            row4 == 0, mse_row,
            jnp.where(row4 == 1, sig_row,
                      jnp.where(row4 == 2, htv_row,
                                jnp.where(lane4 == 0, wtv_scalar, 0.0))))

        @pl.when(h == 0)
        def _():
            out_ref[...] = jnp.zeros_like(out_ref)

        out_ref[...] += upd[None, :, :]

    return kernel


# ---------------------------------------------------------------------------
# Tiling / VMEM-budget helpers
# ---------------------------------------------------------------------------
def _round_up(x, m):
    return -(-x // m) * m


def _vmem_physical_bytes():
    """Physical per-core VMEM (128 MiB on v5e/v6e, 64 MiB on v7x); conservative
    fallback if the query is unavailable."""
    try:
        info = pltpu.get_tpu_info()
        cap = int(getattr(info, "vmem_capacity_bytes", 0) or 0)
        if cap > 0:
            return cap
    except Exception:
        pass
    return 64 * 1024 * 1024


def _pick_h_tile(H, L, itemsize, target_block_bytes, scoped_cap_bytes):
    """Byte-budget-driven H-tile: big enough to amortise the ~0.35us per-grid-
    step overhead, small enough that (2 inputs x 2 pipeline buffers) plus ~8
    block-sized f32 temporaries stay under the per-generation scoped-VMEM cap.
    Accounts for C and W through the per-row byte count (one row = C*W lanes)."""
    quantum = 16 if itemsize < 4 else 8          # (16,128) packing for bf16
    per_row_f32 = L * 4                          # in-kernel temporaries are f32
    budget = min(int(target_block_bytes),
                 max(per_row_f32 * quantum, (scoped_cap_bytes - (2 << 20)) // 12))
    th = (max(budget // per_row_f32, quantum) // quantum) * quantum
    th = max(quantum, th)
    th = min(th, _round_up(H, quantum))          # never larger than (padded) H
    # TODO(synk): for extreme C*W (a single row exceeding the VMEM budget even
    # at TH=8/16) the lane axis itself would need its own grid dimension.
    return int(th)


# ---------------------------------------------------------------------------
# Wrapper: gridded pallas_call + trivial O(B) finalisation in JAX
# ---------------------------------------------------------------------------
def _pair_partial_sums(dnx, inp, *, target_block_bytes):
    B, C, H, W = dnx.shape
    L = C * W

    # Lane-dense layout: map the composite C*W axis onto the 128-lane axis.
    # Pure layout plumbing; producers can emit (B, H, C*W) directly to skip
    # this extra XLA transpose pass.
    dnx2 = jnp.transpose(dnx, (0, 2, 1, 3)).reshape(B, H, L)
    inp2 = jnp.transpose(inp, (0, 2, 1, 3)).reshape(B, H, L)

    itemsize = dnx2.dtype.itemsize
    phys = _vmem_physical_bytes()
    scoped_cap = max(16 << 20, phys // 2)        # ~64 MiB on v5e/v6e, ~32 MiB on v7x

    TH = _pick_h_tile(H, L, itemsize, target_block_bytes, scoped_cap)
    NH = int(pl.cdiv(H, TH))                     # tail tile handled by in-kernel masking

    block_in = TH * L * itemsize                 # one pipeline buffer
    block_f32 = TH * L * 4                       # one in-kernel f32 temporary
    # 2 inputs x 2 pipeline buffers + ~8 block-sized f32 temporaries (masked
    # shifted diffs etc.) + accumulator / carry / headroom.
    vmem_needed = 4 * block_in + 8 * block_f32 + (1 << 20)
    vmem_limit = int(min(scoped_cap, max(8 << 20, vmem_needed)))

    kernel = _make_partial_sums_kernel(H=H, W=W, TH=TH, L=L)

    grid_spec = pltpu.PrefetchScalarGridSpec(
        num_scalar_prefetch=0,
        # batch (independent, megacore-parallel) outer; H-tiles (reduction into
        # the resident per-batch accumulator + 1-row carry) innermost.
        # NOTE: the carry scratch relies on this ordering — do not swap axes.
        grid=(B, NH),
        in_specs=[
            pl.BlockSpec((1, TH, L), lambda b, h: (b, h, 0)),   # dnx
            pl.BlockSpec((1, TH, L), lambda b, h: (b, h, 0)),   # inp
        ],
        out_specs=pl.BlockSpec((1, 4, L), lambda b, h: (b, 0, 0)),
        scratch_shapes=[
            pltpu.VMEM((1, L), jnp.float32),     # last dnx row of previous H-tile
            pltpu.VMEM((1, L), jnp.float32),     # last inp row of previous H-tile
        ],
    )
    # TODO(synk): when B == 1 on v7x (2 TensorCores), add a leading size-2
    # parallel axis splitting the H reduction so both cores stay busy.
    return pl.pallas_call(
        kernel,
        out_shape=jax.ShapeDtypeStruct((B, 4, L), jnp.float32),
        grid_spec=grid_spec,
        compiler_params=pltpu.CompilerParams(
            dimension_semantics=("parallel", "arbitrary"),
            vmem_limit_bytes=vmem_limit,
        ),
    )(dnx2, inp2)


def _pair_loss(dnx, inp, *, mse_weight, tv_weight, sigma_weight, target_block_bytes):
    B, C, H, W = dnx.shape
    parts = _pair_partial_sums(dnx, inp, target_block_bytes=target_block_bytes)

    mse_sum = jnp.sum(parts[:, 0, :])                   # scalar
    sig_sum = jnp.sum(parts[:, 1, :], axis=-1)          # (B,)
    htv_sum = jnp.sum(parts[:, 2, :], axis=-1)          # (B,)
    wtv_sum = jnp.sum(parts[:, 3, :], axis=-1)          # (B,)

    n_total = float(B * C * H * W)
    n_nab = float(C * (H - 1) * W)                      # sigma normaliser
    count_h = float(C * (H - 1) * W)                    # TVLoss count_h
    count_w = float(C * H * (W - 1))                    # TVLoss count_w

    mse = mse_sum / n_total
    sigma = sig_sum * (255.0 * _COEF / n_nab)           # per-batch sigma
    # .detach() in the PyTorch module -> stop_gradient here (forward-identical).
    scale2 = lax.stop_gradient((sigma / float(sigma_weight)) ** 2)
    # TV(dnx * sigma_b / w) == scale2_b * (h_tv_raw_b/count_h + w_tv_raw_b/count_w)
    tv = 2.0 * jnp.sum(scale2 * (htv_sum / count_h + wtv_sum / count_w)) / float(B)
    return float(mse_weight) * mse + float(tv_weight) * tv


def adaptive_denoise_loss(res_dict, mse_weight=1.0, tv_weight=1.0, sigma_weight=5.0,
                          *, target_block_bytes=2 * 1024 * 1024):
    """Forward of AdaptiveDenoiseLoss over the multi-scale lists in res_dict."""
    # TODO(synk): backward (jax.grad) would require a custom_vjp around the
    # pallas_call; only the forward pass is implemented here.
    inp_list = res_dict["nx"]
    dnx_list = res_dict["dnx"]
    total = jnp.float32(0.0)
    # For very small pyramid scales a pure-JAX path would also be reasonable
    # (per-call dispatch overhead vs. a few KiB of data); everything is kept on
    # the Pallas path here so the kernel is always exercised.
    for dnx, inp in zip(dnx_list, inp_list):
        total = total + _pair_loss(
            dnx, inp,
            mse_weight=mse_weight, tv_weight=tv_weight, sigma_weight=sigma_weight,
            target_block_bytes=target_block_bytes,
        )
    return total


# ---------------------------------------------------------------------------
# Pure-JAX reference (correctness check against the PyTorch semantics)
# ---------------------------------------------------------------------------
def _reference_loss(res_dict, mse_weight=1.0, tv_weight=1.0, sigma_weight=5.0):
    total = 0.0
    for dnx, inp in zip(res_dict["dnx"], res_dict["nx"]):
        dnx = dnx.astype(jnp.float32)
        inp = inp.astype(jnp.float32)
        B, C, H, W = dnx.shape
        mse = jnp.mean((dnx - inp) ** 2)
        nab = (inp[:, :, 1:, :] - inp[:, :, :-1, :]) * 255.0
        sigma = jnp.mean(jnp.abs(nab).reshape(B, -1), axis=1) * _COEF
        y = dnx * sigma[:, None, None, None] / sigma_weight
        count_h = C * (H - 1) * W
        count_w = C * H * (W - 1)
        h_tv = jnp.sum((y[:, :, 1:, :] - y[:, :, :-1, :]) ** 2)
        w_tv = jnp.sum((y[:, :, :, 1:] - y[:, :, :, :-1]) ** 2)
        tv = 2.0 * (h_tv / count_h + w_tv / count_w) / B
        total = total + mse_weight * mse + tv_weight * tv
    return total


if __name__ == "__main__":
    # PyTorch __init__ defaults
    MSE_WEIGHT = 1.0
    TV_WEIGHT = 1.0
    SIGMA_WEIGHT = 5.0

    key = jax.random.PRNGKey(0)
    keys = jax.random.split(key, 6)

    B, C = 2, 4
    # Multi-scale list input matching the module's forward over lists; the
    # third (12-row) scale exercises the tail-masked final H-tile.
    shapes = [(B, C, 16, 16), (B, C, 8, 8), (B, C, 12, 16)]
    nx_list, dnx_list = [], []
    for i, s in enumerate(shapes):
        nx = jax.random.uniform(keys[2 * i], s, jnp.float32)
        dnx = nx + 0.05 * jax.random.normal(keys[2 * i + 1], s, jnp.float32)
        nx_list.append(nx)
        dnx_list.append(dnx)
    res_dict = {"nx": nx_list, "dnx": dnx_list}

    ref = jax.block_until_ready(
        _reference_loss(res_dict, MSE_WEIGHT, TV_WEIGHT, SIGMA_WEIGHT))

    # Default byte-budget tiling: each scale fits in one H-tile at these sizes.
    out_big = adaptive_denoise_loss(
        res_dict, MSE_WEIGHT, TV_WEIGHT, SIGMA_WEIGHT)
    out_big = jax.block_until_ready(out_big)
    assert jnp.allclose(out_big, ref, rtol=1e-4, atol=1e-3), (out_big, ref)

    # Tiny tile budget: forces several H-tiles per scale, exercising the
    # cross-tile carry row and the carry + tail-mask combination (12-row scale).
    out_small = adaptive_denoise_loss(
        res_dict, MSE_WEIGHT, TV_WEIGHT, SIGMA_WEIGHT, target_block_bytes=512)
    out_small = jax.block_until_ready(out_small)
    assert jnp.allclose(out_small, ref, rtol=1e-4, atol=1e-3), (out_small, ref)

    print("KERNEL_OK")
</pallas_src>

<mosaic_0001>
module attributes {stable_mosaic.version = 11 : i64} {
  func.func @kernel(%arg0: i32, %arg1: i32, %arg2: memref<1x16x64xf32, #tpu.memory_space<vmem>>, %arg3: memref<1x16x64xf32, #tpu.memory_space<vmem>>, %arg4: memref<1x4x64xf32, #tpu.memory_space<vmem>>, %arg5: memref<1x64xf32, #tpu.memory_space<vmem>>, %arg6: memref<1x64xf32, #tpu.memory_space<vmem>>) attributes {dimension_semantics = [#tpu.dimension_semantics<parallel>, #tpu.dimension_semantics<arbitrary>], iteration_bounds = array<i64: 2, 1>, scalar_prefetch = 0 : i64, scratch_operands = 2 : i64, tpu.core_type = #tpu.core_type<tc>, window_params = [{transform_indices = @transform_0, window_bounds = array<i64: 1, 16, 64>}, {transform_indices = @transform_1, window_bounds = array<i64: 1, 16, 64>}, {transform_indices = @transform_2, window_bounds = array<i64: 1, 4, 64>}]} {
    %c16_i32 = arith.constant 16 : i32
    %0 = arith.muli %arg1, %c16_i32 : i32
    %c0 = arith.constant 0 : index
    %c0_0 = arith.constant 0 : index
    %c0_1 = arith.constant 0 : index
    %1 = vector.load %arg2[%c0, %c0_0, %c0_1] : memref<1x16x64xf32, #tpu.memory_space<vmem>>, vector<1x16x64xf32>
    %2 = vector.shape_cast %1 : vector<1x16x64xf32> to vector<16x64xf32>
    %c0_2 = arith.constant 0 : index
    %c0_3 = arith.constant 0 : index
    %c0_4 = arith.constant 0 : index
    %3 = vector.load %arg3[%c0_2, %c0_3, %c0_4] : memref<1x16x64xf32, #tpu.memory_space<vmem>>, vector<1x16x64xf32>
    %4 = vector.shape_cast %3 : vector<1x16x64xf32> to vector<16x64xf32>
    %5 = tpu.iota {dimensions = array<i32: 0>} : vector<16x64xi32>
    %6 = vector.broadcast %0 : i32 to vector<16x64xi32>
    %7 = arith.addi %6, %5 : vector<16x64xi32>
    %c16_i32_5 = arith.constant 16 : i32
    %8 = vector.broadcast %c16_i32_5 : i32 to vector<16x64xi32>
    %9 = arith.cmpi slt, %7, %8 : vector<16x64xi32>
    %cst = arith.constant 0.000000e+00 : f32
    %10 = vector.broadcast %cst : f32 to vector<16x64xf32>
    %11 = arith.select %9, %2, %10 : vector<16x64xi1>, vector<16x64xf32>
    %cst_6 = arith.constant 0.000000e+00 : f32
    %12 = vector.broadcast %cst_6 : f32 to vector<16x64xf32>
    %13 = arith.select %9, %4, %12 : vector<16x64xi1>, vector<16x64xf32>
    %14 = vector.extract_strided_slice %11 {offsets = [0, 0], sizes = [1, 64], strides = [1, 1]} : vector<16x64xf32> to vector<1x64xf32>
    %c0_7 = arith.constant 0 : index
    %c0_8 = arith.constant 0 : index
    %15 = vector.load %arg5[%c0_7, %c0_8] : memref<1x64xf32, #tpu.memory_space<vmem>>, vector<1x64xf32>
    %16 = arith.subf %14, %15 : vector<1x64xf32>
    %17 = vector.extract_strided_slice %13 {offsets = [0, 0], sizes = [1, 64], strides = [1, 1]} : vector<16x64xf32> to vector<1x64xf32>
    %c0_9 = arith.constant 0 : index
    %c0_10 = arith.constant 0 : index
    %18 = vector.load %arg6[%c0_9, %c0_10] : memref<1x64xf32, #tpu.memory_space<vmem>>, vector<1x64xf32>
    %19 = arith.subf %17, %18 : vector<1x64xf32>
    %c0_i32 = arith.constant 0 : i32
    %20 = arith.cmpi sgt, %arg1, %c0_i32 : i32
    %21 = arith.mulf %16, %16 : vector<1x64xf32>
    %cst_11 = arith.constant 0.000000e+00 : f32
    %22 = vector.broadcast %cst_11 : f32 to vector<1x64xf32>
    %23 = arith.select %20, %21, %22 : vector<1x64xf32>
    %24 = math.absf %19 : vector<1x64xf32>
    %cst_12 = arith.constant 0.000000e+00 : f32
    %25 = vector.broadcast %cst_12 : f32 to vector<1x64xf32>
    %26 = arith.select %20, %24, %25 : vector<1x64xf32>
    %27 = vector.extract_strided_slice %11 {offsets = [15, 0], sizes = [1, 64], strides = [1, 1]} : vector<16x64xf32> to vector<1x64xf32>
    %c0_13 = arith.constant 0 : index
    %c0_14 = arith.constant 0 : index
    %28 = vector.load %arg5[%c0_13, %c0_14] : memref<1x64xf32, #tpu.memory_space<vmem>>, vector<1x64xf32>
    tpu.vector_store %arg5[%c0_13, %c0_14], %27 {strides = array<i32>} : memref<1x64xf32, #tpu.memory_space<vmem>>, vector<1x64xf32>,
    %29 = vector.extract_strided_slice %13 {offsets = [15, 0], sizes = [1, 64], strides = [1, 1]} : vector<16x64xf32> to vector<1x64xf32>
    %c0_15 = arith.constant 0 : index
    %c0_16 = arith.constant 0 : index
    %30 = vector.load %arg6[%c0_15, %c0_16] : memref<1x64xf32, #tpu.memory_space<vmem>>, vector<1x64xf32>
    tpu.vector_store %arg6[%c0_15, %c0_16], %29 {strides = array<i32>} : memref<1x64xf32, #tpu.memory_space<vmem>>, vector<1x64xf32>,
    %31 = arith.subf %11, %13 : vector<16x64xf32>
    %32 = arith.mulf %31, %31 : vector<16x64xf32>
    %cst_17 = arith.constant dense<0.000000e+00> : vector<64xf32>
    %33 = vector.multi_reduction <add>, %32, %cst_17 [0] : vector<16x64xf32> to vector<64xf32>
    %34 = vector.shape_cast %33 : vector<64xf32> to vector<1x64xf32>
    %35 = tpu.iota {dimensions = array<i32: 0>} : vector<15x64xi32>
    %36 = vector.broadcast %0 : i32 to vector<15x64xi32>
    %37 = arith.addi %36, %35 : vector<15x64xi32>
    %c1_i32 = arith.constant 1 : i32
    %38 = vector.broadcast %c1_i32 : i32 to vector<15x64xi32>
    %39 = arith.addi %37, %38 : vector<15x64xi32>
    %c16_i32_18 = arith.constant 16 : i32
    %40 = vector.broadcast %c16_i32_18 : i32 to vector<15x64xi32>
    %41 = arith.cmpi slt, %39, %40 : vector<15x64xi32>
    %42 = vector.extract_strided_slice %11 {offsets = [1, 0], sizes = [15, 64], strides = [1, 1]} : vector<16x64xf32> to vector<15x64xf32>
    %43 = vector.extract_strided_slice %11 {offsets = [0, 0], sizes = [15, 64], strides = [1, 1]} : vector<16x64xf32> to vector<15x64xf32>
    %44 = arith.subf %42, %43 : vector<15x64xf32>
    %cst_19 = arith.constant 0.000000e+00 : f32
    %45 = vector.broadcast %cst_19 : f32 to vector<15x64xf32>
    %46 = arith.select %41, %44, %45 : vector<15x64xi1>, vector<15x64xf32>
    %47 = vector.extract_strided_slice %13 {offsets = [1, 0], sizes = [15, 64], strides = [1, 1]} : vector<16x64xf32> to vector<15x64xf32>
    %48 = vector.extract_strided_slice %13 {offsets = [0, 0], sizes = [15, 64], strides = [1, 1]} : vector<16x64xf32> to vector<15x64xf32>
    %49 = arith.subf %47, %48 : vector<15x64xf32>
    %50 = math.absf %49 : vector<15x64xf32>
    %cst_20 = arith.constant 0.000000e+00 : f32
    %51 = vector.broadcast %cst_20 : f32 to vector<15x64xf32>
    %52 = arith.select %41, %50, %51 : vector<15x64xi1>, vector<15x64xf32>
    %53 = arith.mulf %46, %46 : vector<15x64xf32>
    %cst_21 = arith.constant dense<0.000000e+00> : vector<64xf32>
    %54 = vector.multi_reduction <add>, %53, %cst_21 [0] : vector<15x64xf32> to vector<64xf32>
    %55 = vector.shape_cast %54 : vector<64xf32> to vector<1x64xf32>
    %56 = arith.addf %55, %23 : vector<1x64xf32>
    %cst_22 = arith.constant dense<0.000000e+00> : vector<64xf32>
    %57 = vector.multi_reduction <add>, %52, %cst_22 [0] : vector<15x64xf32> to vector<64xf32>
    %58 = vector.shape_cast %57 : vector<64xf32> to vector<1x64xf32>
    %59 = arith.addf %58, %26 : vector<1x64xf32>
    %60 = tpu.iota {dimensions = array<i32: 1>} : vector<16x63xi32>
    %c16_i32_23 = arith.constant 16 : i32
    %c0_i32_24 = arith.constant 0 : i32
    %61 = arith.cmpi eq, %c16_i32_23, %c0_i32_24 : i32
    %c1_i32_25 = arith.constant 1 : i32
    %62 = arith.select %61, %c1_i32_25, %c16_i32_23 : i32
    %63 = vector.broadcast %62 : i32 to vector<16x63xi32>
    %64 = arith.remsi %60, %63 : vector<16x63xi32>
    %c0_i32_26 = arith.constant 0 : i32
    %65 = vector.broadcast %c0_i32_26 : i32 to vector<16x63xi32>
    %66 = arith.cmpi ne, %64, %65 : vector<16x63xi32>
    %c0_i32_27 = arith.constant 0 : i32
    %67 = vector.broadcast %c0_i32_27 : i32 to vector<16x63xi32>
    %68 = arith.cmpi slt, %64, %67 : vector<16x63xi32>
    %c0_i32_28 = arith.constant 0 : i32
    %69 = arith.cmpi slt, %62, %c0_i32_28 : i32
    %70 = vector.broadcast %69 : i1 to vector<16x63xi1>
    %71 = vector.broadcast %70 : vector<16x63xi1> to vector<16x63xi1>
    %72 = arith.xori %68, %71 : vector<16x63xi1>
    %73 = arith.andi %72, %66 : vector<16x63xi1>
    %74 = vector.broadcast %62 : i32 to vector<16x63xi32>
    %75 = arith.addi %64, %74 : vector<16x63xi32>
    %76 = arith.select %73, %75, %64 : vector<16x63xi1>, vector<16x63xi32>
    %c15_i32 = arith.constant 15 : i32
    %77 = vector.broadcast %c15_i32 : i32 to vector<16x63xi32>
    %78 = arith.cmpi ne, %76, %77 : vector<16x63xi32>
    %79 = vector.extract_strided_slice %11 {offsets = [0, 1], sizes = [16, 63], strides = [1, 1]} : vector<16x64xf32> to vector<16x63xf32>
    %80 = vector.extract_strided_slice %11 {offsets = [0, 0], sizes = [16, 63], strides = [1, 1]} : vector<16x64xf32> to vector<16x63xf32>
    %81 = arith.subf %79, %80 : vector<16x63xf32>
    %cst_29 = arith.constant 0.000000e+00 : f32
    %82 = vector.broadcast %cst_29 : f32 to vector<16x63xf32>
    %83 = arith.select %78, %81, %82 : vector<16x63xi1>, vector<16x63xf32>
    %84 = arith.mulf %83, %83 : vector<16x63xf32>
    %85 = vector.shape_cast %84 : vector<16x63xf32> to vector<1x16x63xf32>
    %cst_30 = arith.constant dense<0.000000e+00> : vector<1xf32>
    %86 = vector.multi_reduction <add>, %85, %cst_30 [1, 2] : vector<1x16x63xf32> to vector<1xf32>
    %87 = vector.shape_cast %86 : vector<1xf32> to vector<1x1x1xf32>
    %88 = vector.extract %87[0, 0, 0] : f32 from vector<1x1x1xf32>
    %89 = tpu.iota {dimensions = array<i32: 0>} : vector<4x64xi32>
    %90 = tpu.iota {dimensions = array<i32: 1>} : vector<4x64xi32>
    %c0_i32_31 = arith.constant 0 : i32
    %91 = vector.broadcast %c0_i32_31 : i32 to vector<4x64xi32>
    %92 = arith.cmpi eq, %89, %91 : vector<4x64xi32>
    %c1_i32_32 = arith.constant 1 : i32
    %93 = vector.broadcast %c1_i32_32 : i32 to vector<4x64xi32>
    %94 = arith.cmpi eq, %89, %93 : vector<4x64xi32>
    %c2_i32 = arith.constant 2 : i32
    %95 = vector.broadcast %c2_i32 : i32 to vector<4x64xi32>
    %96 = arith.cmpi eq, %89, %95 : vector<4x64xi32>
    %c0_i32_33 = arith.constant 0 : i32
    %97 = vector.broadcast %c0_i32_33 : i32 to vector<4x64xi32>
    %98 = arith.cmpi eq, %90, %97 : vector<4x64xi32>
    %cst_34 = arith.constant 0.000000e+00 : f32
    %99 = vector.broadcast %88 : f32 to vector<4x64xf32>
    %100 = vector.broadcast %cst_34 : f32 to vector<4x64xf32>
    %101 = arith.select %98, %99, %100 : vector<4x64xi1>, vector<4x64xf32>
    %102 = vector.shape_cast %56 : vector<1x64xf32> to vector<1x64xf32>
    %103 = vector.broadcast %102 : vector<1x64xf32> to vector<4x64xf32>
    %104 = arith.select %96, %103, %101 : vector<4x64xi1>, vector<4x64xf32>
    %105 = vector.shape_cast %59 : vector<1x64xf32> to vector<1x64xf32>
    %106 = vector.broadcast %105 : vector<1x64xf32> to vector<4x64xf32>
    %107 = arith.select %94, %106, %104 : vector<4x64xi1>, vector<4x64xf32>
    %108 = vector.shape_cast %34 : vector<1x64xf32> to vector<1x64xf32>
    %109 = vector.broadcast %108 : vector<1x64xf32> to vector<4x64xf32>
    %110 = arith.select %92, %109, %107 : vector<4x64xi1>, vector<4x64xf32>
    %c0_i32_35 = arith.constant 0 : i32
    %111 = arith.cmpi eq, %arg1, %c0_i32_35 : i32
    %112 = arith.extui %111 : i1 to i32
    %c0_i32_36 = arith.constant 0 : i32
    %113 = arith.cmpi ne, %112, %c0_i32_36 : i32
    scf.if %113 {
      %cst_43 = arith.constant 0.000000e+00 : f32
      %118 = vector.broadcast %cst_43 : f32 to vector<1x4x64xf32>
      %c0_44 = arith.constant 0 : index
      %c0_45 = arith.constant 0 : index
      %c0_46 = arith.constant 0 : index
      %119 = vector.load %arg4[%c0_44, %c0_45, %c0_46] : memref<1x4x64xf32, #tpu.memory_space<vmem>>, vector<1x4x64xf32>
      tpu.vector_store %arg4[%c0_44, %c0_45, %c0_46], %118 {strides = array<i32>} : memref<1x4x64xf32, #tpu.memory_space<vmem>>, vector<1x4x64xf32>,
    } else {
    }
    %c0_37 = arith.constant 0 : index
    %c0_38 = arith.constant 0 : index
    %c0_39 = arith.constant 0 : index
    %114 = vector.load %arg4[%c0_37, %c0_38, %c0_39] : memref<1x4x64xf32, #tpu.memory_space<vmem>>, vector<1x4x64xf32>
    %115 = vector.shape_cast %110 : vector<4x64xf32> to vector<1x4x64xf32>
    %116 = arith.addf %114, %115 : vector<1x4x64xf32>
    %c0_40 = arith.constant 0 : index
    %c0_41 = arith.constant 0 : index
    %c0_42 = arith.constant 0 : index
    %117 = vector.load %arg4[%c0_40, %c0_41, %c0_42] : memref<1x4x64xf32, #tpu.memory_space<vmem>>, vector<1x4x64xf32>
    tpu.vector_store %arg4[%c0_40, %c0_41, %c0_42], %116 {strides = array<i32>} : memref<1x4x64xf32, #tpu.memory_space<vmem>>, vector<1x4x64xf32>,
    return
  }
  func.func @transform_0(%arg0: i32, %arg1: i32) -> (i32, i32, i32) {
    %c0_i32 = arith.constant 0 : i32
    %c0_i32_0 = arith.constant 0 : i32
    return %arg0, %arg1, %c0_i32 : i32, i32, i32
  }
  func.func @transform_1(%arg0: i32, %arg1: i32) -> (i32, i32, i32) {
    %c0_i32 = arith.constant 0 : i32
    %c0_i32_0 = arith.constant 0 : i32
    return %arg0, %arg1, %c0_i32 : i32, i32, i32
  }
  func.func @transform_2(%arg0: i32, %arg1: i32) -> (i32, i32, i32) {
    %c0_i32 = arith.constant 0 : i32
    %c0_i32_0 = arith.constant 0 : i32
    %c0_i32_1 = arith.constant 0 : i32
    return %arg0, %c0_i32, %c0_i32_0 : i32, i32, i32
  }
}

</mosaic_0001>

<llo_original>
// kernel: tpu_custom_call.1
$region0: #{tpu_custom_call.1}
  #allocation0 [shape = 'u32[]', space=smem, size = 0x4, offset = 0x4, fixed_abs, tag = 'smem constant byte address 0x4 - core index']
  #allocation1 [shape = 'u32[144,128]{1,0:T(1,128)}', space=vmem, size = 0x12000, scoped, tag = 'internal scratch']
  #allocation2 [shape = 'f32[1,64]{1,0:T(1,128)}', space=vmem, size = 0x200, scoped, tag = 'scratch operand']
  #allocation3 [shape = 'f32[1,64]{1,0:T(1,128)}', space=vmem, size = 0x200, scoped, tag = 'scratch operand']
  %s0 = inlined_call_operand.hbm [shape: f32[2,16,64], index: 0, kind: input, shape index: {}]
  %s1 = inlined_call_operand.hbm [shape: f32[2,16,64], index: 1, kind: input, shape index: {}]
  %s2 = inlined_call_operand.hbm [shape: f32[2,4,64], index: 2, kind: output, shape index: {}]
  %s3 = sld [smem:[#allocation0]]
  $region53: #{tpu_custom_call.1} parent=0
    _
  %s5 = ssub.s32 1, %s3
  %s6 = scalar_select 0, %s5, %s3
  $region1: #{tpu_custom_call.1} parent=0
    #allocation4 [shape = 'u8[16384]{0}', space=vmem, size = 0x4000, scoped, tag = 'input window, operand 0']
    #allocation5 [shape = 's32[2]{0}', space=sflag, size = 0x8, scoped, tag = 'scoped memory for tpu_custom_call.1']
    #allocation6 [shape = 's32[2]{0}', space=sflag, size = 0x8, scoped, tag = 'scoped memory for tpu_custom_call.1']
    #allocation7 [shape = 'u8[16384]{0}', space=vmem, size = 0x4000, scoped, tag = 'input window, operand 1']
    #allocation8 [shape = 's32[2]{0}', space=sflag, size = 0x8, scoped, tag = 'scoped memory for tpu_custom_call.1']
    #allocation9 [shape = 'u8[4096]{0}', space=vmem, size = 0x1000, scoped, tag = 'output window, operand 0']
    %7 = vsyncpa [#allocation5], 0
    %s8 = scalar_lea.sflag [#allocation5], 1
    %9 = vsyncpa %s8, 0
    %10 = vsyncpa [#allocation8], 0
    %s11 = scalar_lea.sflag [#allocation8], 1
    %12 = vsyncpa %s11, 0
    %13 = vsyncpa [#allocation6], 0
    %s14 = scalar_lea.sflag [#allocation6], 1
    %15 = vsyncpa %s14, 0
    loop: start=0, step=1, limit=4
    $region2: #{tpu_custom_call.1} parent=1 // loop_pre_header
      _
    $region3: #{tpu_custom_call.1} parent=1 // loop_header
      %s17 = sphi 0, %s21
      %p18 = scmp.ge.s32.totalorder %s17, 4
      %s24 = sphi 0, %s36
      %s25 = sphi 0, %s32
      %s26 = sphi 0, %s24
      %s27 = sphi 0, %s25
      %s28 = sphi 0, %s26
      %s29 = sphi 0, %s27
      %s41 = sphi 0, %s43
      %s44 = sphi 0, %s41
      %s45 = sphi 0, %s44
      %s61 = sphi 0, %s45
      %s69 = sphi 0, %s71
      %s72 = sphi 0, %s69
      %s73 = sphi 0, %s72
      %s89 = sphi 0, %s73
      %s95 = sphi 0, %s97
      %s98 = sphi 0, %s95
      %s99 = sphi 0, %s98
      %s115 = sphi 0, %s99
    $region4: #{tpu_custom_call.1} parent=1 // loop_header_branch
      %20 = sbr.rel (%p18) target = $region8
    $region5: #{tpu_custom_call.1} parent=1 // loop_body
      %s22 = ssub.s32 %s17, 1
      %s23 = ssub.s32 %s17, 2
      %s30 = sadd.s32 1, %s25
      %p31 = scmp.ge.s32.totalorder %s30, 1
      %s32 = scalar_select %p31, 0, %s30
      %s33 = sadd.s32 1, %s24
      %s34 = scalar_select %p31, %s33, %s24
      %p35 = scmp.ge.s32.totalorder %s34, 2
      %s36 = scalar_select %p35, 0, %s34
      %s37 = ssub.s32 %s24, %s36
      %s38 = ssub.s32 %s25, %s32
      %s39 = sor.u32 %s37, %s38
      %p40 = scmp.eq.s32.totalorder %s39, 0
      %s42 = sadd.s32 %s41, 1
      %s43 = scalar_select %p40, %s41, %s42
      %p46 = pneg %p40
      %p47 = scmp.eq.s32.totalorder %s17, 1
      %p48 = por %p46, %p47
      %p49 = scmp.ne.s32.totalorder %s41, %s44
      %p50 = scmp.eq.s32.totalorder %s17, 0
      %p51 = por %p49, %p50
      %p52 = scmp.ne.s32.totalorder %s41, %s44
      %p53 = scmp.eq.s32.totalorder %s22, 1
      %p54 = por %p52, %p53
      %p55 = scmp.ne.s32.totalorder %s44, %s45
      %p56 = scmp.eq.s32.totalorder %s22, 0
      %p57 = por %p55, %p56
      %p58 = scmp.ne.s32.totalorder %s44, %s45
      %p59 = scmp.eq.s32.totalorder %s23, 1
      %p60 = por %p58, %p59
      %p62 = scmp.ne.s32.totalorder %s45, %s61
      %p63 = scmp.eq.s32.totalorder %s23, 0
      %p64 = por %p62, %p63
      %s65 = ssub.s32 %s24, %s36
      %s66 = ssub.s32 %s25, %s32
      %s67 = sor.u32 %s65, %s66
      %p68 = scmp.eq.s32.totalorder %s67, 0
      %s70 = sadd.s32 %s69, 1
      %s71 = scalar_select %p68, %s69, %s70
      %p74 = pneg %p68
      %p75 = scmp.eq.s32.totalorder %s17, 1
      %p76 = por %p74, %p75
      %p77 = scmp.ne.s32.totalorder %s69, %s72
      %p78 = scmp.eq.s32.totalorder %s17, 0
      %p79 = por %p77, %p78
      %p80 = scmp.ne.s32.totalorder %s69, %s72
      %p81 = scmp.eq.s32.totalorder %s22, 1
      %p82 = por %p80, %p81
      %p83 = scmp.ne.s32.totalorder %s72, %s73
      %p84 = scmp.eq.s32.totalorder %s22, 0
      %p85 = por %p83, %p84
      %p86 = scmp.ne.s32.totalorder %s72, %s73
      %p87 = scmp.eq.s32.totalorder %s23, 1
      %p88 = por %p86, %p87
      %p90 = scmp.ne.s32.totalorder %s73, %s89
      %p91 = scmp.eq.s32.totalorder %s23, 0
      %p92 = por %p90, %p91
      %s93 = ssub.s32 %s24, %s36
      %p94 = scmp.eq.s32.totalorder %s93, 0
      %s96 = sadd.s32 %s95, 1
      %s97 = scalar_select %p94, %s95, %s96
      %p100 = pneg %p94
      %p101 = scmp.eq.s32.totalorder %s17, 1
      %p102 = por %p100, %p101
      %p103 = scmp.ne.s32.totalorder %s95, %s98
      %p104 = scmp.eq.s32.totalorder %s17, 0
      %p105 = por %p103, %p104
      %p106 = scmp.ne.s32.totalorder %s95, %s98
      %p107 = scmp.eq.s32.totalorder %s22, 1
      %p108 = por %p106, %p107
      %p109 = scmp.ne.s32.totalorder %s98, %s99
      %p110 = scmp.eq.s32.totalorder %s22, 0
      %p111 = por %p109, %p110
      %p112 = scmp.ne.s32.totalorder %s98, %s99
      %p113 = scmp.eq.s32.totalorder %s23, 1
      %p114 = por %p112, %p113
      %p116 = scmp.ne.s32.totalorder %s99, %s115
      %p117 = scmp.eq.s32.totalorder %s23, 0
      %p118 = por %p116, %p117
      %p119 = scmp.le.s32.totalorder 1, %s17
      %p120 = scmp.lt.s32.totalorder %s17, 3
      %p121 = pnand %p119, %p120
      %p122 = pneg %p121
      // Predicated region
      $region9: #{tpu_custom_call.1} parent=5 // pred_check
        _
      $region10: #{tpu_custom_call.1} parent=5 // pred_check_branch
        %124 = sbr.rel (%p121) target = $region12
      $region11: #{tpu_custom_call.1} parent=5 // pred_region
        %s125 = ssub.s32 %s17, 1
      $region12: #{tpu_custom_call.1} parent=5 // pred_fallthru
        _
      %p126 = scmp.lt.s32.totalorder %s17, 2
      // Predicated region
      $region13: #{tpu_custom_call.1} parent=5 // pred_check
        %p127 = pneg %p126
      $region14: #{tpu_custom_call.1} parent=5 // pred_check_branch
        %129 = sbr.rel (%p127) target = $region16
      $region15: #{tpu_custom_call.1} parent=5 // pred_region
        // Predicated region
        $region17: #{tpu_custom_call.1} parent=15 // pred_check
          %p130 = pneg %p51
        $region18: #{tpu_custom_call.1} parent=15 // pred_check_branch
          %132 = sbr.rel (%p130) target = $region20
        $region19: #{tpu_custom_call.1} parent=15 // pred_region
          %s133 = sand.u32 %s41, 1
          %s134 = scalar_lea.sflag [#allocation5], %s133
          %s135 = sand.u32 %s41, 1
          %s136 = smul.addr %s135, 16
          %s137 = scalar_lea.vmem [#allocation4], %s136
          %s138 = smul.u32 2, %s25
          %s140 = ssub.s32 256, 256
          %141 = vsyncadd %s134, %s140
          %s142 = smul.addr %s24, 2
          %s143 = sadd.s32 %s138, %s142
          %s144 = smul.addr %s143, 128
          %s145 = scalar_lea.hbm %s0, %s144
          %s146 = sshll.u32 %s137, 4
          %s147 = int_to_ptr.vmem [resolvable:$true] %s146
          %152 = dma.hbm_to_vmem [thread:$0]  %s145, 256, %s147, %s134, 128, 128, 8
        $region20: #{tpu_custom_call.1} parent=15 // pred_fallthru
          _
        // Predicated region
        $region21: #{tpu_custom_call.1} parent=15 // pred_check
          %p153 = pneg %p79
        $region22: #{tpu_custom_call.1} parent=15 // pred_check_branch
          %155 = sbr.rel (%p153) target = $region24
        $region23: #{tpu_custom_call.1} parent=15 // pred_region
          %s156 = sand.u32 %s69, 1
          %s157 = scalar_lea.sflag [#allocation8], %s156
          %s158 = sand.u32 %s69, 1
          %s159 = smul.addr %s158, 16
          %s160 = scalar_lea.vmem [#allocation7], %s159
          %s161 = smul.u32 2, %s25
          %s163 = ssub.s32 256, 256
          %164 = vsyncadd %s157, %s163
          %s165 = smul.addr %s24, 2
          %s166 = sadd.s32 %s161, %s165
          %s167 = smul.addr %s166, 128
          %s168 = scalar_lea.hbm %s1, %s167
          %s169 = sshll.u32 %s160, 4
          %s170 = int_to_ptr.vmem [resolvable:$true] %s169
          %175 = dma.hbm_to_vmem [thread:$0]  %s168, 256, %s170, %s157, 128, 128, 8
        $region24: #{tpu_custom_call.1} parent=15 // pred_fallthru
          _
      $region16: #{tpu_custom_call.1} parent=5 // pred_fallthru
        _
      %p176 = scmp.le.s32.totalorder 1, %s17
      %p177 = scmp.lt.s32.totalorder %s17, 3
      %p178 = pnand %p176, %p177
      %p179 = pneg %p178
      // Predicated region
      $region25: #{tpu_custom_call.1} parent=5 // pred_check
        _
      $region26: #{tpu_custom_call.1} parent=5 // pred_check_branch
        %181 = sbr.rel (%p178) target = $region28
      $region27: #{tpu_custom_call.1} parent=5 // pred_region
        %s182 = ssub.s32 %s17, 1
        %s183 = sand.u32 %s44, 1
        %s184 = scalar_lea.sflag [#allocation5], %s183
        %s185 = sand.u32 %s44, 1
        %s186 = smul.addr %s185, 16
        %s187 = scalar_lea.vmem [#allocation4], %s186
        // Predicated region
        $region29: #{tpu_custom_call.1} parent=27 // pred_check
          %p188 = pneg %p57
        $region30: #{tpu_custom_call.1} parent=27 // pred_check_branch
          %190 = sbr.rel (%p188) target = $region32
        $region31: #{tpu_custom_call.1} parent=27 // pred_region
          %191 = dma.done %s184, 256
        $region32: #{tpu_custom_call.1} parent=27 // pred_fallthru
          _
        %s192 = sand.u32 %s72, 1
        %s193 = scalar_lea.sflag [#allocation8], %s192
        %s194 = sand.u32 %s72, 1
        %s195 = smul.addr %s194, 16
        %s196 = scalar_lea.vmem [#allocation7], %s195
        // Predicated region
        $region33: #{tpu_custom_call.1} parent=27 // pred_check
          %p197 = pneg %p85
        $region34: #{tpu_custom_call.1} parent=27 // pred_check_branch
          %199 = sbr.rel (%p197) target = $region36
        $region35: #{tpu_custom_call.1} parent=27 // pred_region
          %200 = dma.done %s193, 256
        $region36: #{tpu_custom_call.1} parent=27 // pred_fallthru
          _
        %s201 = sand.u32 %s44, 1
        %s202 = scalar_lea.sflag [#allocation5], %s201
        %s203 = sand.u32 %s44, 1
        %s204 = smul.addr %s203, 16
        %s205 = scalar_lea.vmem [#allocation4], %s204
        %p206 = pneg %p57
        %p207 = pneg %p54
        %s208 = sand.u32 %s72, 1
        %s209 = scalar_lea.sflag [#allocation8], %s208
        %s210 = sand.u32 %s72, 1
        %s211 = smul.addr %s210, 16
        %s212 = scalar_lea.vmem [#allocation7], %s211
        %p213 = pneg %p85
        %p214 = pneg %p82
        %p215 = pneg %p111
        %p216 = pneg %p108
        %s217 = sand.u32 %s98, 1
        %s218 = scalar_lea.sflag [#allocation6], %s217
        %s219 = sand.u32 %s98, 1
        %s220 = smul.addr %s219, 4
        %s221 = scalar_lea.vmem [#allocation9], %s220
        %s222 = smul.u32 2, %s27
        %s223 = smul.u32 2, %s27
        %s224 = smul.u32 %s27, 16
        %v225 = vld [vmem:[%s187] sm:$0xff]
        %v226 = vld [vmem:[%s187 + $0x8] sm:$0xff]
        %v227 = vld [vmem:[%s196] sm:$0xff]
        %v228 = vld [vmem:[%s196 + $0x8] sm:$0xff]
        %v229 = vlaneseq
        %v230 = vshrl.u32 %v229, 7
        %v231 = vadd.s32 %v230, 8
        %v232 = vstv %s224
        %v233 = vadd.s32 %v232, %v230
        %v234 = vadd.s32 %v232, %v231
        %vm235 = vcmp.lt.s32.totalorder %v233, 16
        %vm236 = vcmp.lt.s32.totalorder %v234, 16
        %v237 = vsel %vm235, %v225, 0.0
        %v238 = vsel %vm236, %v226, 0.0
        %v239 = vsel %vm235, %v227, 0.0
        %v240 = vsel %vm236, %v228, 0.0
        %v241 = vld [vmem:[#allocation2] sm:$0x1]
        %v242 = vsub.f32 %v237, %v241
        %v243 = vld [vmem:[#allocation3] sm:$0x1]
        %v244 = vsub.f32 %v239, %v243
        %p245 = scmp.gt.s32.totalorder %s27, 0
        %v246 = vmul.f32 %v242, %v242
        %s247 = scalar_select %p245, 1, 0
        %v248 = vstv %s247
        %vm249 = vcmp.eq.s32.totalorder %v248, 1
        %v250 = vsel %vm249, %v246, 0.0
        %v251 = vand.u32 2147483647, %v244
        %v252 = vsel %vm249, %v251, 0.0
        %vm253 = vcmask 523271
        %254 = vst.msk [vmem:[#allocation2 - $0x7] sm:$0x80] %vm253, %v238
        %255 = vst.msk [vmem:[#allocation3 - $0x7] sm:$0x80] %vm253, %v240
        %v256 = vsub.f32 %v237, %v239
        %v257 = vsub.f32 %v238, %v240
        %v258 = vmul.f32 %v256, %v256
        %v259 = vmul.f32 %v257, %v257
        %vm260 = vcmask 523264
        %v261 = vsel %vm260, %v258, 0.0
        %v262 = vsel %vm260, %v259, 0.0
        %v263 = vadd.f32 %v261, %v262
        %v264 = vrot.slane %v263, 4
        %v265 = vadd.f32 %v263, %v264
        %v266 = vrot.slane %v265, 2
        %v267 = vadd.f32 %v265, %v266
        %v268 = vrot.slane %v267, 1
        %v269 = vadd.f32 %v267, %v268
        %v270 = vadd.s32 %v233, 1
        %v271 = vadd.s32 %v234, 1
        %vm272 = vcmp.lt.s32.totalorder %v270, 16
        %vm273 = vcmp.lt.s32.totalorder %v271, 16
        %vm276 = vcmask 1040384
        %v277 = vrot.slane %v237, 7
        %v278 = vrot.slane %v238, 7
        %v279 = vsel %vm276, %v277, %v278
        %v282 = vsub.f32 %v237, %v277
        %v283 = vsub.f32 %v238, %v279
        %vm286 = vcmask 1046528
        %v287 = vrot.slane %v282, 1
        %v288 = vrot.slane %v283, 1
        %v289 = vsel %vm286, %v287, %v288
        %v292 = vsel %vm272, %v289, 0.0
        %v293 = vsel %vm273, %v288, 0.0
        %v296 = vrot.slane %v239, 7
        %v297 = vrot.slane %v240, 7
        %v298 = vsel %vm276, %v296, %v297
        %v301 = vsub.f32 %v239, %v296
        %v302 = vsub.f32 %v240, %v298
        %v303 = vand.u32 2147483647, %v301
        %v304 = vand.u32 2147483647, %v302
        %v307 = vrot.slane %v303, 1
        %v308 = vrot.slane %v304, 1
        %v309 = vsel %vm286, %v307, %v308
        %v312 = vsel %vm272, %v309, 0.0
        %v313 = vsel %vm273, %v308, 0.0
        %v314 = vmul.f32 %v292, %v292
        %v315 = vmul.f32 %v293, %v293
        %v316 = vsel %vm260, %v314, 0.0
        %vm317 = vcmask 522240
        %v318 = vsel %vm317, %v315, 0.0
        %v319 = vadd.f32 %v316, %v318
        %v320 = vrot.slane %v319, 4
        %v321 = vadd.f32 %v319, %v320
        %v322 = vrot.slane %v321, 2
        %v323 = vadd.f32 %v321, %v322
        %v324 = vrot.slane %v323, 1
        %v325 = vadd.f32 %v323, %v324
        %v326 = vadd.f32 %v325, %v250
        %v327 = vsel %vm260, %v312, 0.0
        %v328 = vsel %vm317, %v313, 0.0
        %v329 = vadd.f32 %v327, %v328
        %v330 = vrot.slane %v329, 4
        %v331 = vadd.f32 %v329, %v330
        %v332 = vrot.slane %v331, 2
        %v333 = vadd.f32 %v331, %v332
        %v334 = vrot.slane %v333, 1
        %v335 = vadd.f32 %v333, %v334
        %v336 = vadd.f32 %v335, %v252
        %v337 = vlaneseq
        %v338 = vand.u32 %v337, 127
        %vm339 = vcmp.lt.s32.totalorder %v338, 0
        %v340 = vsub.s32 0, %v338
        %v341 = vsel %vm339, %v340, %v338
        %v342 = vshrl.u32 %v341, 4
        %v343 = vand.u32 %v341, 15
        %v344 = vsub.s32 0, %v343
        %v345 = vsel %vm339, %v344, %v343
        %vm346 = vcmp.ne.s32.totalorder %v345, 0
        %vm347 = vcmp.lt.s32.totalorder %v345, 0
        %vm348 = vmand %vm347, %vm346
        %v349 = vadd.s32 %v345, 16
        %v350 = vsel %vm348, %v349, %v345
        %vm351 = vcmp.ne.s32.totalorder %v350, 15
        %352 = vrot.lane.b32.xlu0 %v237, 1
        %v353 = vpop.permute.xlu0 %352
        %354 = vrot.lane.b32.xlu0 %v238, 1
        %v355 = vpop.permute.xlu0 %354
        %v358 = vsub.f32 %v237, %v353
        %v359 = vsub.f32 %v238, %v355
        %362 = vrot.lane.b32.xlu0 %v358, 127
        %v363 = vpop.permute.xlu0 %362
        %364 = vrot.lane.b32.xlu0 %v359, 127
        %v365 = vpop.permute.xlu0 %364
        %v368 = vsel %vm351, %v363, 0.0
        %v369 = vsel %vm351, %v365, 0.0
        %v370 = vmul.f32 %v368, %v368
        %v371 = vmul.f32 %v369, %v369
        %vm372 = vcmask 515072
        %v373 = vsel %vm372, %v370, 0.0
        %v374 = vsel %vm372, %v371, 0.0
        %v375 = vadd.f32 %v373, %v374
        %376 = vadd.xlane.f32.xlu0 %v375
        %v377 = vpop.xlane.xlu0 %376
        %v378 = vrot.slane %v377, 4
        %v379 = vadd.f32 %v377, %v378
        %v380 = vrot.slane %v379, 2
        %v381 = vadd.f32 %v379, %v380
        %v382 = vrot.slane %v381, 1
        %v383 = vadd.f32 %v381, %v382
        %s384 = vtos %v383
        %vm385 = vcmp.eq.s32.totalorder %v230, 0
        %vm386 = vcmp.eq.s32.totalorder %v230, 1
        %vm387 = vcmp.eq.s32.totalorder %v230, 2
        %vm388 = vcmp.eq.s32.totalorder %v338, 0
        %v389 = vstv %s384
        %v390 = vsel %vm388, %v389, 0.0
        %v391 = vlaneseq
        %v392 = vshrl.u32 %v391, 7
        %v393 = vsub.s32 0, %v392
        %v394 = vrot.slane %v326, %v393
        %v395 = vsel %vm387, %v394, %v390
        %v396 = vlaneseq
        %v397 = vshrl.u32 %v396, 7
        %v398 = vsub.s32 0, %v397
        %v399 = vrot.slane %v336, %v398
        %v400 = vsel %vm386, %v399, %v395
        %v401 = vsel %vm385, %v269, %v400
        %p402 = scmp.eq.s32.totalorder %s27, 0
        // Predicated region
        $region37: #{tpu_custom_call.1} parent=27 // pred_check
          %p403 = pneg %p402
        $region38: #{tpu_custom_call.1} parent=27 // pred_check_branch
          %405 = sbr.rel (%p403) target = $region40
        $region39: #{tpu_custom_call.1} parent=27 // pred_region
          %vm406 = vcmask 519168
          %407 = vst.msk [vmem:[%s221] sm:$0xf] %vm406, 0.0
        $region40: #{tpu_custom_call.1} parent=27 // pred_fallthru
          _
        %v408 = vld [vmem:[%s221] sm:$0xf]
        %v409 = vadd.f32 %v408, %v401
        %vm410 = vcmask 519168
        %411 = vst.msk [vmem:[%s221] sm:$0xf] %vm410, %v409
        %s412 = sand.u32 %s98, 1
        %s413 = scalar_lea.sflag [#allocation6], %s412
        %s414 = sand.u32 %s98, 1
        %s415 = smul.addr %s414, 4
        %s416 = scalar_lea.vmem [#allocation9], %s415
        // Predicated region
        $region41: #{tpu_custom_call.1} parent=27 // pred_check
          %p417 = pneg %p108
        $region42: #{tpu_custom_call.1} parent=27 // pred_check_branch
          %419 = sbr.rel (%p417) target = $region44
        $region43: #{tpu_custom_call.1} parent=27 // pred_region
          %s421 = ssub.s32 64, 64
          %422 = vsyncadd %s413, %s421
          %s423 = smul.addr %s26, 64
          %s424 = scalar_lea.hbm %s2, %s423
          %s426 = sshll.u32 %s416, 4
          %s427 = int_to_ptr.vmem [resolvable:$true] %s426
          %429 = dma.vmem_to_hbm [thread:$0]  %s427, 64, %s424, %s413
        $region44: #{tpu_custom_call.1} parent=27 // pred_fallthru
          _
      $region28: #{tpu_custom_call.1} parent=5 // pred_fallthru
        _
      %p430 = scmp.le.s32.totalorder 2, %s17
      // Predicated region
      $region45: #{tpu_custom_call.1} parent=5 // pred_check
        %p431 = pneg %p430
      $region46: #{tpu_custom_call.1} parent=5 // pred_check_branch
        %433 = sbr.rel (%p431) target = $region48
      $region47: #{tpu_custom_call.1} parent=5 // pred_region
        %s434 = ssub.s32 %s17, 2
        // Predicated region
        $region49: #{tpu_custom_call.1} parent=47 // pred_check
          %p435 = pneg %p114
        $region50: #{tpu_custom_call.1} parent=47 // pred_check_branch
          %437 = sbr.rel (%p435) target = $region52
        $region51: #{tpu_custom_call.1} parent=47 // pred_region
          %s438 = sand.u32 %s99, 1
          %s439 = scalar_lea.sflag [#allocation6], %s438
          %s440 = sand.u32 %s99, 1
          %s441 = smul.addr %s440, 4
          %s442 = scalar_lea.vmem [#allocation9], %s441
          %443 = dma.done %s439, 64
        $region52: #{tpu_custom_call.1} parent=47 // pred_fallthru
          _
      $region48: #{tpu_custom_call.1} parent=5 // pred_fallthru
        _
    $region6: #{tpu_custom_call.1} parent=1 // loop_footer
      %s21 = sadd.s32 1, %s17
    $region7: #{tpu_custom_call.1} parent=1 // loop_footer_branch
      %16 = sbr.rel target = $region3
    $region8: #{tpu_custom_call.1} parent=1 // loop_exit
      _
    %444 = vsyncpa [#allocation5], 1
    %s445 = scalar_lea.sflag [#allocation5], 1
    %446 = vsyncpa %s445, 1
    %447 = vsyncpa [#allocation8], 1
    %s448 = scalar_lea.sflag [#allocation8], 1
    %449 = vsyncpa %s448, 1
    %450 = vsyncpa [#allocation6], 1
    %s451 = scalar_lea.sflag [#allocation6], 1
    %452 = vsyncpa %s451, 1

</llo_original>
